<compile_context>
chip_gen: v7x
topology: tpu7x:2x2x1
jax: 0.10.0
libtpu: 0.0.40
codegen_flags: <defaults>
</compile_context>

<pallas_src>
import jax
import jax.numpy as jnp
from jax.experimental import pallas as pl
from jax.experimental.pallas import tpu as pltpu


def make_textcnn_kernel(filter_sizes, filter_num):
    F_num = filter_num

    def kernel(x_ref, wcat_ref, bcat_ref, fcw_ref, fcb_ref, o_ref):
        Bt, L, D = x_ref.shape

        # Single fused MXU matmul covering every tap of every filter size.
        x = x_ref[...].reshape(Bt * L, D)                 # bf16, contiguous
        y = jnp.dot(x, wcat_ref[...],
                    preferred_element_type=jnp.float32)   # (Bt*L, T*F) f32
        y = y.reshape(Bt, L, -1)                          # (Bt, L, T*F)

        bias_all = bcat_ref[...]                          # (1, n*F) f32

        pooled = []
        off = 0
        for i, s in enumerate(filter_sizes):
            L_out = L - s + 1
            # conv[b, t, f] = sum_k y[b, t+k, (off+k)*F + f]
            acc = y[:, 0:L_out, off * F_num:(off + 1) * F_num]
            for k in range(1, s):
                c0 = (off + k) * F_num
                acc = acc + y[:, k:k + L_out, c0:c0 + F_num]
            # max over time first; bias+ReLU are monotone per-channel, so
            # relu(max_t(acc) + b) == max_t relu(acc + b).
            mx = jnp.max(acc, axis=1)                     # (Bt, F) f32
            bias = bias_all[:, i * F_num:(i + 1) * F_num] # (1, F)
            pooled.append(jnp.maximum(mx + bias, 0.0))    # (Bt, F)
            off += s

        feat = jnp.concatenate(pooled, axis=-1)           # (Bt, n*F) f32
        # dropout: nn.Dropout is identity in eval mode (inference semantics)
        logits = jnp.dot(feat.astype(fcw_ref.dtype), fcw_ref[...],
                         preferred_element_type=jnp.float32) + fcb_ref[...]
        o_ref[...] = logits.astype(o_ref.dtype)

    return kernel


def _pick_batch_tile(B):
    # Output block is (Bt, C): Bt must be a multiple of 8 or equal to B, and
    # should divide B so the grid is exact.
    if B <= 256 or B % 8 != 0:
        return B
    for bt in range(256, 0, -8):
        if B % bt == 0:
            return bt
    return B


def textcnn_forward(token_ids, emb_table, conv_ws, conv_bs, fc_w, fc_b,
                    filter_sizes, compute_dtype=jnp.bfloat16):
    """token_ids: (B, L) int32. Returns logits (B, class_num) float32."""
    B, L = token_ids.shape
    D = emb_table.shape[1]
    F_num = conv_ws[0].shape[0]
    C = fc_w.shape[0]
    n = len(filter_sizes)

    # ---- plain-JAX glue ------------------------------------------------------
    # embedding lookup (gather); cast operands to bf16 for the MXU.
    x_emb = jnp.take(emb_table, token_ids, axis=0).astype(compute_dtype)  # (B,L,D)

    # Fuse all conv taps into one matmul operand:
    # PyTorch conv weight (F, 1, s, D) -> per-tap (D, F) slabs -> concat (D, T*F)
    tap_slabs = []
    for w in conv_ws:
        w_sdf = jnp.transpose(w[:, 0, :, :], (1, 2, 0))    # (s, D, F)
        for k in range(w_sdf.shape[0]):
            tap_slabs.append(w_sdf[k])                     # (D, F)
    wcat = jnp.concatenate(tap_slabs, axis=-1).astype(compute_dtype)  # (D, T*F)

    bcat = jnp.concatenate(conv_bs).reshape(1, n * F_num).astype(jnp.float32)
    fcw_t = fc_w.T.astype(compute_dtype)                   # (n*F, C)
    fcb = fc_b.reshape(1, C).astype(jnp.float32)           # (1, C)

    # ---- batch grid (parallel => shards across v7x's 2 TensorCores) ---------
    Bt = _pick_batch_tile(B)
    grid = (B // Bt,)

    kernel = make_textcnn_kernel(filter_sizes, F_num)

    def full_block(a):
        # whole-array block, resident across all grid steps
        nd = a.ndim
        return pl.BlockSpec(a.shape, lambda i, _nd=nd: (0,) * _nd)

    return pl.pallas_call(
        kernel,
        out_shape=jax.ShapeDtypeStruct((B, C), jnp.float32),
        grid=grid,
        in_specs=[
            pl.BlockSpec((Bt, L, D), lambda i: (i, 0, 0)),   # batch-blocked x
            full_block(wcat),
            full_block(bcat),
            full_block(fcw_t),
            full_block(fcb),
        ],
        out_specs=pl.BlockSpec((Bt, C), lambda i: (i, 0)),
        compiler_params=pltpu.CompilerParams(
            dimension_semantics=("parallel",)),
    )(x_emb, wcat, bcat, fcw_t, fcb)


def textcnn_reference(token_ids, emb_table, conv_ws, conv_bs, fc_w, fc_b,
                      filter_sizes):
    """Pure-JAX f32 reference matching the PyTorch forward (eval mode)."""
    x = jnp.take(emb_table, token_ids, axis=0).astype(jnp.float32)  # (B,L,D)
    pooled = []
    for i, s in enumerate(filter_sizes):
        W = conv_ws[i][:, 0, :, :]                 # (F, s, D)
        b = conv_bs[i]                             # (F,)
        L_out = x.shape[1] - s + 1
        outs = []
        for t in range(L_out):
            win = x[:, t:t + s, :]                 # (B, s, D)
            outs.append(jnp.einsum('bsd,fsd->bf', win, W) + b)
        score = jnp.stack(outs, axis=2)            # (B, F, L_out)
        score = jnp.maximum(score, 0.0)
        pooled.append(jnp.max(score, axis=2))      # (B, F)
    feat = jnp.concatenate(pooled, axis=1)
    return feat @ fc_w.T + fc_b


if __name__ == "__main__":
    # small config consistent with the module
    batch = 2
    seq_len = 16
    vocabulary_size = 50
    embedding_dim = 32
    filter_num = 8
    filter_sizes = (3, 4, 5)
    class_num = 3
    # multichannel=False, static=False, dropout inactive (eval)

    key = jax.random.PRNGKey(0)
    keys = jax.random.split(key, 4 + 2 * len(filter_sizes))

    token_ids = jax.random.randint(keys[0], (batch, seq_len), 0,
                                   vocabulary_size, dtype=jnp.int32)
    emb_table = jax.random.normal(keys[1], (vocabulary_size, embedding_dim),
                                  jnp.float32) * 0.1

    conv_ws, conv_bs = [], []
    for i, s in enumerate(filter_sizes):
        conv_ws.append(jax.random.normal(
            keys[2 + 2 * i], (filter_num, 1, s, embedding_dim),
            jnp.float32) * 0.1)
        conv_bs.append(jax.random.normal(
            keys[3 + 2 * i], (filter_num,), jnp.float32) * 0.1)

    fc_w = jax.random.normal(keys[-2],
                             (class_num, len(filter_sizes) * filter_num),
                             jnp.float32) * 0.1
    fc_b = jax.random.normal(keys[-1], (class_num,), jnp.float32) * 0.1

    logits = textcnn_forward(token_ids, emb_table, conv_ws, conv_bs,
                             fc_w, fc_b, filter_sizes)
    logits = jax.block_until_ready(logits)

    ref = textcnn_reference(token_ids, emb_table, conv_ws, conv_bs,
                            fc_w, fc_b, filter_sizes)
    assert logits.shape == (batch, class_num)
    # bf16 matmul operands (f32 accumulation) => loosened tolerance vs f32 ref
    assert jnp.allclose(logits, ref, atol=2e-2, rtol=2e-2), (
        jnp.max(jnp.abs(logits - ref)))

    print("KERNEL_OK")
</pallas_src>

<mosaic_0001>
module attributes {stable_mosaic.version = 11 : i64} {
  func.func @kernel(%arg0: i32, %arg1: memref<2x16x32xbf16, #tpu.memory_space<vmem>>, %arg2: memref<32x96xbf16, #tpu.memory_space<vmem>>, %arg3: memref<1x24xf32, #tpu.memory_space<vmem>>, %arg4: memref<24x3xbf16, #tpu.memory_space<vmem>>, %arg5: memref<1x3xf32, #tpu.memory_space<vmem>>, %arg6: memref<2x3xf32, #tpu.memory_space<vmem>>) attributes {dimension_semantics = [#tpu.dimension_semantics<parallel>], iteration_bounds = array<i64: 1>, scalar_prefetch = 0 : i64, scratch_operands = 0 : i64, tpu.core_type = #tpu.core_type<tc>, window_params = [{transform_indices = @transform_0, window_bounds = array<i64: 2, 16, 32>}, {pipeline_mode = #tpu.pipeline_mode<synchronous>, transform_indices = @transform_1, window_bounds = array<i64: 32, 96>}, {pipeline_mode = #tpu.pipeline_mode<synchronous>, transform_indices = @transform_2, window_bounds = array<i64: 1, 24>}, {pipeline_mode = #tpu.pipeline_mode<synchronous>, transform_indices = @transform_3, window_bounds = array<i64: 24, 3>}, {pipeline_mode = #tpu.pipeline_mode<synchronous>, transform_indices = @transform_4, window_bounds = array<i64: 1, 3>}, {transform_indices = @transform_5, window_bounds = array<i64: 2, 3>}]} {
    %c0 = arith.constant 0 : index
    %c0_0 = arith.constant 0 : index
    %c0_1 = arith.constant 0 : index
    %0 = vector.load %arg1[%c0, %c0_0, %c0_1] : memref<2x16x32xbf16, #tpu.memory_space<vmem>>, vector<2x16x32xbf16>
    %1 = vector.shape_cast %0 : vector<2x16x32xbf16> to vector<32x32xbf16>
    %c0_2 = arith.constant 0 : index
    %c0_3 = arith.constant 0 : index
    %2 = vector.load %arg2[%c0_2, %c0_3] : memref<32x96xbf16, #tpu.memory_space<vmem>>, vector<32x96xbf16>
    %cst = arith.constant dense<0.000000e+00> : vector<32x96xf32>
    %3 = tpu.matmul %1, %2, %cst {dimension_numbers = #tpu.dot_dimension_numbers<[1], [0], [0], [1], [0, 0, 1, 1], [], []>} : vector<32x32xbf16>, vector<32x96xbf16>, vector<32x96xf32> -> vector<32x96xf32>
    %4 = vector.shape_cast %3 : vector<32x96xf32> to vector<2x16x96xf32>
    %c0_4 = arith.constant 0 : index
    %c0_5 = arith.constant 0 : index
    %5 = vector.load %arg3[%c0_4, %c0_5] : memref<1x24xf32, #tpu.memory_space<vmem>>, vector<1x24xf32>
    %6 = vector.extract_strided_slice %4 {offsets = [0, 0, 0], sizes = [2, 14, 8], strides = [1, 1, 1]} : vector<2x16x96xf32> to vector<2x14x8xf32>
    %7 = vector.extract_strided_slice %4 {offsets = [0, 1, 8], sizes = [2, 14, 8], strides = [1, 1, 1]} : vector<2x16x96xf32> to vector<2x14x8xf32>
    %8 = arith.addf %6, %7 : vector<2x14x8xf32>
    %9 = vector.extract_strided_slice %4 {offsets = [0, 2, 16], sizes = [2, 14, 8], strides = [1, 1, 1]} : vector<2x16x96xf32> to vector<2x14x8xf32>
    %10 = arith.addf %8, %9 : vector<2x14x8xf32>
    %cst_6 = arith.constant dense<0xFF800000> : vector<2x8xf32>
    %11 = vector.multi_reduction <maximumf>, %10, %cst_6 [1] : vector<2x14x8xf32> to vector<2x8xf32>
    %12 = vector.extract_strided_slice %5 {offsets = [0, 0], sizes = [1, 8], strides = [1, 1]} : vector<1x24xf32> to vector<1x8xf32>
    %13 = vector.broadcast %12 : vector<1x8xf32> to vector<2x8xf32>
    %14 = arith.addf %11, %13 : vector<2x8xf32>
    %cst_7 = arith.constant 0.000000e+00 : f32
    %15 = vector.broadcast %cst_7 : f32 to vector<2x8xf32>
    %16 = arith.maximumf %14, %15 : vector<2x8xf32>
    %17 = vector.extract_strided_slice %4 {offsets = [0, 0, 24], sizes = [2, 13, 8], strides = [1, 1, 1]} : vector<2x16x96xf32> to vector<2x13x8xf32>
    %18 = vector.extract_strided_slice %4 {offsets = [0, 1, 32], sizes = [2, 13, 8], strides = [1, 1, 1]} : vector<2x16x96xf32> to vector<2x13x8xf32>
    %19 = arith.addf %17, %18 : vector<2x13x8xf32>
    %20 = vector.extract_strided_slice %4 {offsets = [0, 2, 40], sizes = [2, 13, 8], strides = [1, 1, 1]} : vector<2x16x96xf32> to vector<2x13x8xf32>
    %21 = arith.addf %19, %20 : vector<2x13x8xf32>
    %22 = vector.extract_strided_slice %4 {offsets = [0, 3, 48], sizes = [2, 13, 8], strides = [1, 1, 1]} : vector<2x16x96xf32> to vector<2x13x8xf32>
    %23 = arith.addf %21, %22 : vector<2x13x8xf32>
    %cst_8 = arith.constant dense<0xFF800000> : vector<2x8xf32>
    %24 = vector.multi_reduction <maximumf>, %23, %cst_8 [1] : vector<2x13x8xf32> to vector<2x8xf32>
    %25 = vector.extract_strided_slice %5 {offsets = [0, 8], sizes = [1, 8], strides = [1, 1]} : vector<1x24xf32> to vector<1x8xf32>
    %26 = vector.broadcast %25 : vector<1x8xf32> to vector<2x8xf32>
    %27 = arith.addf %24, %26 : vector<2x8xf32>
    %cst_9 = arith.constant 0.000000e+00 : f32
    %28 = vector.broadcast %cst_9 : f32 to vector<2x8xf32>
    %29 = arith.maximumf %27, %28 : vector<2x8xf32>
    %30 = vector.extract_strided_slice %4 {offsets = [0, 0, 56], sizes = [2, 12, 8], strides = [1, 1, 1]} : vector<2x16x96xf32> to vector<2x12x8xf32>
    %31 = vector.extract_strided_slice %4 {offsets = [0, 1, 64], sizes = [2, 12, 8], strides = [1, 1, 1]} : vector<2x16x96xf32> to vector<2x12x8xf32>
    %32 = arith.addf %30, %31 : vector<2x12x8xf32>
    %33 = vector.extract_strided_slice %4 {offsets = [0, 2, 72], sizes = [2, 12, 8], strides = [1, 1, 1]} : vector<2x16x96xf32> to vector<2x12x8xf32>
    %34 = arith.addf %32, %33 : vector<2x12x8xf32>
    %35 = vector.extract_strided_slice %4 {offsets = [0, 3, 80], sizes = [2, 12, 8], strides = [1, 1, 1]} : vector<2x16x96xf32> to vector<2x12x8xf32>
    %36 = arith.addf %34, %35 : vector<2x12x8xf32>
    %37 = vector.extract_strided_slice %4 {offsets = [0, 4, 88], sizes = [2, 12, 8], strides = [1, 1, 1]} : vector<2x16x96xf32> to vector<2x12x8xf32>
    %38 = arith.addf %36, %37 : vector<2x12x8xf32>
    %cst_10 = arith.constant dense<0xFF800000> : vector<2x8xf32>
    %39 = vector.multi_reduction <maximumf>, %38, %cst_10 [1] : vector<2x12x8xf32> to vector<2x8xf32>
    %40 = vector.extract_strided_slice %5 {offsets = [0, 16], sizes = [1, 8], strides = [1, 1]} : vector<1x24xf32> to vector<1x8xf32>
    %41 = vector.broadcast %40 : vector<1x8xf32> to vector<2x8xf32>
    %42 = arith.addf %39, %41 : vector<2x8xf32>
    %cst_11 = arith.constant 0.000000e+00 : f32
    %43 = vector.broadcast %cst_11 : f32 to vector<2x8xf32>
    %44 = arith.maximumf %42, %43 : vector<2x8xf32>
    %45 = tpu.concatenate %16, %29, %44 in 1 : vector<2x8xf32>, vector<2x8xf32>, vector<2x8xf32> -> vector<2x24xf32>
    %46 = arith.truncf %45 : vector<2x24xf32> to vector<2x24xbf16>
    %c0_12 = arith.constant 0 : index
    %c0_13 = arith.constant 0 : index
    %47 = vector.load %arg4[%c0_12, %c0_13] : memref<24x3xbf16, #tpu.memory_space<vmem>>, vector<24x3xbf16>
    %cst_14 = arith.constant dense<0.000000e+00> : vector<2x3xf32>
    %48 = tpu.matmul %46, %47, %cst_14 {dimension_numbers = #tpu.dot_dimension_numbers<[1], [0], [0], [1], [0, 0, 1, 1], [], []>} : vector<2x24xbf16>, vector<24x3xbf16>, vector<2x3xf32> -> vector<2x3xf32>
    %c0_15 = arith.constant 0 : index
    %c0_16 = arith.constant 0 : index
    %49 = vector.load %arg5[%c0_15, %c0_16] : memref<1x3xf32, #tpu.memory_space<vmem>>, vector<1x3xf32>
    %50 = vector.broadcast %49 : vector<1x3xf32> to vector<2x3xf32>
    %51 = arith.addf %48, %50 : vector<2x3xf32>
    %c0_17 = arith.constant 0 : index
    %c0_18 = arith.constant 0 : index
    %52 = vector.load %arg6[%c0_17, %c0_18] : memref<2x3xf32, #tpu.memory_space<vmem>>, vector<2x3xf32>
    tpu.vector_store %arg6[%c0_17, %c0_18], %51 {strides = array<i32>} : memref<2x3xf32, #tpu.memory_space<vmem>>, vector<2x3xf32>,
    return
  }
  func.func @transform_0(%arg0: i32) -> (i32, i32, i32) {
    %c0_i32 = arith.constant 0 : i32
    %c0_i32_0 = arith.constant 0 : i32
    %c0_i32_1 = arith.constant 0 : i32
    return %arg0, %c0_i32, %c0_i32_0 : i32, i32, i32
  }
  func.func @transform_1(%arg0: i32) -> (i32, i32) {
    %c0_i32 = arith.constant 0 : i32
    %c0_i32_0 = arith.constant 0 : i32
    %c0_i32_1 = arith.constant 0 : i32
    return %c0_i32, %c0_i32_0 : i32, i32
  }
  func.func @transform_2(%arg0: i32) -> (i32, i32) {
    %c0_i32 = arith.constant 0 : i32
    %c0_i32_0 = arith.constant 0 : i32
    %c0_i32_1 = arith.constant 0 : i32
    return %c0_i32, %c0_i32_0 : i32, i32
  }
  func.func @transform_3(%arg0: i32) -> (i32, i32) {
    %c0_i32 = arith.constant 0 : i32
    %c0_i32_0 = arith.constant 0 : i32
    %c0_i32_1 = arith.constant 0 : i32
    return %c0_i32, %c0_i32_0 : i32, i32
  }
  func.func @transform_4(%arg0: i32) -> (i32, i32) {
    %c0_i32 = arith.constant 0 : i32
    %c0_i32_0 = arith.constant 0 : i32
    %c0_i32_1 = arith.constant 0 : i32
    return %c0_i32, %c0_i32_0 : i32, i32
  }
  func.func @transform_5(%arg0: i32) -> (i32, i32) {
    %c0_i32 = arith.constant 0 : i32
    %c0_i32_0 = arith.constant 0 : i32
    return %arg0, %c0_i32 : i32, i32
  }
}

</mosaic_0001>

<llo_original>
// kernel: tpu_custom_call.1
$region0: #{tpu_custom_call.1}
  #allocation0 [shape = 'u32[]', space=smem, size = 0x4, offset = 0x4, fixed_abs, tag = 'smem constant byte address 0x4 - core index']
  #allocation1 [shape = 'u32[144,128]{1,0:T(1,128)}', space=vmem, size = 0x12000, scoped, tag = 'internal scratch']
  %s0 = inlined_call_operand.hbm [shape: bf16[2,16,32], index: 0, kind: input, shape index: {}]
  %s1 = inlined_call_operand.vmem [shape: bf16[32,96], index: 1, kind: input, shape index: {}]
  %s2 = inlined_call_operand.vmem [shape: f32[1,24], index: 2, kind: input, shape index: {}]
  %s3 = inlined_call_operand.vmem [shape: bf16[24,3], index: 3, kind: input, shape index: {}]
  %s4 = inlined_call_operand.vmem [shape: f32[1,3], index: 4, kind: input, shape index: {}]
  %s5 = inlined_call_operand.hbm [shape: f32[2,3], index: 5, kind: output, shape index: {}]
  %s6 = sld [smem:[#allocation0]]
  $region34: #{tpu_custom_call.1} parent=0
    _
  %s8 = ssub.s32 1, %s6
  %s9 = scalar_select 0, %s8, %s6
  $region1: #{tpu_custom_call.1} parent=0
    #allocation2 [shape = 'u8[8192]{0}', space=vmem, size = 0x2000, scoped, tag = 'input window, operand 0, single buffered']
    #allocation3 [shape = 's32[1]{0}', space=sflag, size = 0x4, scoped, tag = 'scoped memory for tpu_custom_call.1']
    #allocation4 [shape = 's32[1]{0}', space=sflag, size = 0x4, scoped, tag = 'scoped memory for tpu_custom_call.1']
    #allocation5 [shape = 'u8[1024]{0}', space=vmem, size = 0x400, scoped, tag = 'output window, operand 0, single buffered']
    %10 = vsyncpa [#allocation3], 0
    %11 = vsyncpa [#allocation4], 0
    // Predicated region
    $region2: #{tpu_custom_call.1} parent=1 // pred_check
      _
    $region3: #{tpu_custom_call.1} parent=1 // pred_check_branch
      %13 = sbr.rel (0) target = $region5
    $region4: #{tpu_custom_call.1} parent=1 // pred_region
      %s15 = ssub.s32 256, 256
      %16 = vsyncadd [#allocation3], %s15
      %s17 = sshll.u32 [#allocation2], 4
      %s18 = int_to_ptr.vmem [resolvable:$true] %s17
      %23 = dma.hbm_to_vmem [thread:$0]  %s0, 256, %s18, [#allocation3], 64, 64, 4
    $region5: #{tpu_custom_call.1} parent=1 // pred_fallthru
      _
    // Predicated region
    $region6: #{tpu_custom_call.1} parent=1 // pred_check
      _
    $region7: #{tpu_custom_call.1} parent=1 // pred_check_branch
      %25 = sbr.rel (0) target = $region9
    $region8: #{tpu_custom_call.1} parent=1 // pred_region
      _
    $region9: #{tpu_custom_call.1} parent=1 // pred_fallthru
      _
    // Predicated region
    $region10: #{tpu_custom_call.1} parent=1 // pred_check
      _
    $region11: #{tpu_custom_call.1} parent=1 // pred_check_branch
      %27 = sbr.rel (0) target = $region13
    $region12: #{tpu_custom_call.1} parent=1 // pred_region
      _
    $region13: #{tpu_custom_call.1} parent=1 // pred_fallthru
      _
    // Predicated region
    $region14: #{tpu_custom_call.1} parent=1 // pred_check
      _
    $region15: #{tpu_custom_call.1} parent=1 // pred_check_branch
      %29 = sbr.rel (0) target = $region17
    $region16: #{tpu_custom_call.1} parent=1 // pred_region
      _
    $region17: #{tpu_custom_call.1} parent=1 // pred_fallthru
      _
    // Predicated region
    $region18: #{tpu_custom_call.1} parent=1 // pred_check
      _
    $region19: #{tpu_custom_call.1} parent=1 // pred_check_branch
      %31 = sbr.rel (0) target = $region21
    $region20: #{tpu_custom_call.1} parent=1 // pred_region
      _
    $region21: #{tpu_custom_call.1} parent=1 // pred_fallthru
      _
    // Predicated region
    $region22: #{tpu_custom_call.1} parent=1 // pred_check
      _
    $region23: #{tpu_custom_call.1} parent=1 // pred_check_branch
      %33 = sbr.rel (0) target = $region25
    $region24: #{tpu_custom_call.1} parent=1 // pred_region
      %34 = dma.done [#allocation3], 256
    $region25: #{tpu_custom_call.1} parent=1 // pred_fallthru
      _
    %v36 = vld [vmem:[#allocation2] sm:$0xf]
    %v37 = vld [vmem:[#allocation2 + $0x4] sm:$0xf]
    %v38 = vld [vmem:[#allocation2 + $0x8] sm:$0xf]
    %v39 = vld [vmem:[#allocation2 + $0xc] sm:$0xf]
    %v40 = vld [vmem:[%s1] sm:$0xf]
    %v41 = vld [vmem:[%s1 + $0x4] sm:$0xf]
    %v42 = vld [vmem:[%s1 + $0x8] sm:$0xf]
    %v43 = vld [vmem:[%s1 + $0xc] sm:$0xf]
    %v48 = vunpack.c.l.b16 %v36
    %v49 = vunpack.c.l.b16 %v37
    %v50 = vunpack.c.l.b16 %v38
    %v51 = vunpack.c.l.b16 %v39
    %v52 = vpack.c.b16 %v49, %v48
    %v53 = vpack.c.b16 %v51, %v50
    %v58 = vunpack.c.l.b16 %v40
    %v59 = vunpack.c.l.b16 %v41
    %v60 = vunpack.c.l.b16 %v42
    %v61 = vunpack.c.l.b16 %v43
    %v62 = vpack.c.b16 %v59, %v58
    %v63 = vpack.c.b16 %v61, %v60
    %vm66 = vcmask 261120
    %v68 = vsel %vm66, %v52, 0
    %v71 = vsel %vm66, %v53, 0
    %73 = vmatprep.subr.bf16.mxu0 0
    %74 = vmatpush1.bf16.msra.mxu0 %v62
    %75 = vmatprep.subr.bf16.mxu0 0
    %76 = vmatpush1.bf16.msra.mxu0 %v63
    %77 = vmatprep.subr.bf16.mxu0 0
    %78 = vmatpush1.bf16.msra.mxu0 0
    %79 = vmatprep.subr.bf16.mxu0 0
    %80 = vmatpush1.bf16.msra.mxu0 0
    %81 = vmatprep.subr.bf16.mxu0 0
    %82 = vmatpush1.bf16.msra.mxu0 0
    %83 = vmatprep.subr.bf16.mxu0 0
    %84 = vmatpush1.bf16.msra.mxu0 0
    %85 = vmatprep.subr.bf16.mxu0 0
    %86 = vmatpush1.bf16.msra.mxu0 0
    %87 = vmatprep.subr.bf16.mxu0 0
    %88 = vmatpush1.bf16.msra.mxu0 0
    %89 = vmatprep.subr.bf16.mxu0 0
    %90 = vmatpush1.bf16.msra.mxu0 0
    %91 = vmatprep.subr.bf16.mxu0 0
    %92 = vmatpush1.bf16.msra.mxu0 0
    %93 = vmatprep.subr.bf16.mxu0 0
    %94 = vmatpush1.bf16.msra.mxu0 0
    %95 = vmatprep.subr.bf16.mxu0 0
    %96 = vmatpush1.bf16.msra.mxu0 0
    %97 = vmatprep.subr.bf16.mxu0 0
    %98 = vmatpush1.bf16.msra.mxu0 0
    %99 = vmatprep.subr.bf16.mxu0 0
    %100 = vmatpush1.bf16.msra.mxu0 0
    %101 = vmatprep.subr.bf16.mxu0 0
    %102 = vmatpush1.bf16.msra.mxu0 0
    %103 = vmatprep.subr.bf16.mxu0 0
    %104 = vmatpush1.bf16.msra.mxu0 0
    %105 = vmatprep.mubr.bf16.mxu0 0
    %106 = vmatmul.mubr.bf16.gmra.mrb[0].mxu0 %v68
    %v107 = vpop.f32.mrb[0].mxu0
    %v108 = vadd.f32 0.0, %v107
    %v109 = vpop.f32.mrb[0].mxu0
    %v110 = vpop.f32.mrb[0].mxu0
    %v111 = vadd.f32 0.0, %v110
    %v112 = vpop.f32.mrb[0].mxu0
    %113 = vmatprep.mubr.bf16.mxu0 0
    %114 = vmatmul.mubr.bf16.gmra.mrb[0].mxu0 %v71
    %v115 = vpop.f32.mrb[0].mxu0
    %v116 = vadd.f32 0.0, %v115
    %v117 = vpop.f32.mrb[0].mxu0
    %v118 = vpop.f32.mrb[0].mxu0
    %v119 = vadd.f32 0.0, %v118
    %v120 = vpop.f32.mrb[0].mxu0
    %121 = vdwg.mxu0
    %v122 = vld [vmem:[%s2] sm:$0x1]
    %vm127 = vcmask 1046528
    %v128 = vrot.slane %v108, 1
    %v129 = vrot.slane %v111, 1
    %v130 = vsel %vm127, %v128, %v129
    %v131 = vrot.slane %v116, 1
    %v132 = vrot.slane %v119, 1
    %v133 = vsel %vm127, %v131, %v132
    %134 = vrot.lane.b32.xlu0 %v130, 120
    %v135 = vpop.permute.xlu0 %134
    %136 = vrot.lane.b32.xlu0 %v129, 120
    %v137 = vpop.permute.xlu0 %136
    %138 = vrot.lane.b32.xlu0 %v133, 120
    %v139 = vpop.permute.xlu0 %138
    %140 = vrot.lane.b32.xlu0 %v132, 120
    %v141 = vpop.permute.xlu0 %140
    %v146 = vadd.f32 %v108, %v135
    %v147 = vadd.f32 %v111, %v137
    %v148 = vadd.f32 %v116, %v139
    %v149 = vadd.f32 %v119, %v141
    %vm150 = vcmask 1045504
    %v151 = vrot.slane %v108, 2
    %v152 = vrot.slane %v111, 2
    %v153 = vsel %vm150, %v151, %v152
    %v154 = vrot.slane %v116, 2
    %v155 = vrot.slane %v119, 2
    %v156 = vsel %vm150, %v154, %v155
    %157 = vrot.lane.b32.xlu0 %v153, 112
    %v158 = vpop.permute.xlu0 %157
    %159 = vrot.lane.b32.xlu0 %v152, 112
    %v160 = vpop.permute.xlu0 %159
    %161 = vrot.lane.b32.xlu0 %v156, 112
    %v162 = vpop.permute.xlu0 %161
    %163 = vrot.lane.b32.xlu0 %v155, 112
    %v164 = vpop.permute.xlu0 %163
    %v169 = vadd.f32 %v146, %v158
    %v170 = vadd.f32 %v147, %v160
    %v171 = vadd.f32 %v148, %v162
    %v172 = vadd.f32 %v149, %v164
    %vm173 = vcmask 64512
    %v174 = vsel %vm173, %v169, -inf
    %vm175 = vcmask 62464
    %v176 = vsel %vm175, %v170, -inf
    %v177 = vmax.f32 %v174, %v176
    %v178 = vrot.slane %v177, 4
    %v179 = vmax.f32 %v177, %v178
    %v180 = vrot.slane %v179, 2
    %v181 = vmax.f32 %v179, %v180
    %v182 = vrot.slane %v181, 1
    %v183 = vmax.f32 %v181, %v182
    %v184 = vsel %vm173, %v171, -inf
    %v185 = vsel %vm175, %v172, -inf
    %v186 = vmax.f32 %v184, %v185
    %v187 = vrot.slane %v186, 4
    %v188 = vmax.f32 %v186, %v187
    %v189 = vrot.slane %v188, 2
    %v190 = vmax.f32 %v188, %v189
    %v191 = vrot.slane %v190, 1
    %v192 = vmax.f32 %v190, %v191
    %v194 = vlaneseq
    %v195 = vshrl.u32 %v194, 7
    %v196 = vsub.s32 0, %v195
    %v197 = vrot.slane %v122, %v196
    %v199 = vadd.f32 %v183, %v197
    %v200 = vadd.f32 %v192, %v197
    %v201 = vmax.f32 %v199, 0.0
    %v202 = vmax.f32 %v200, 0.0
    %vm203 = vcmask 1044480
    %v204 = vrot.slane %v108, 3
    %v205 = vrot.slane %v111, 3
    %v206 = vsel %vm203, %v204, %v205
    %v207 = vrot.slane %v116, 3
    %v208 = vrot.slane %v119, 3
    %v209 = vsel %vm203, %v207, %v208
    %210 = vrot.lane.b32.xlu0 %v206, 104
    %v211 = vpop.permute.xlu0 %210
    %212 = vrot.lane.b32.xlu0 %v205, 104
    %v213 = vpop.permute.xlu0 %212
    %214 = vrot.lane.b32.xlu0 %v209, 104
    %v215 = vpop.permute.xlu0 %214
    %216 = vrot.lane.b32.xlu0 %v208, 104
    %v217 = vpop.permute.xlu0 %216
    %v222 = vadd.f32 %v169, %v211
    %v223 = vadd.f32 %v170, %v213
    %v224 = vadd.f32 %v171, %v215
    %v225 = vadd.f32 %v172, %v217
    %vm226 = vcmask 261312
    %v227 = vsel %vm226, %v222, -inf
    %vm228 = vcmask 258240
    %v229 = vsel %vm228, %v223, -inf
    %v230 = vmax.f32 %v227, %v229
    %v231 = vrot.slane %v230, 4
    %v232 = vmax.f32 %v230, %v231
    %v233 = vrot.slane %v232, 2
    %v234 = vmax.f32 %v232, %v233
    %v235 = vrot.slane %v234, 1
    %v236 = vmax.f32 %v234, %v235
    %v237 = vsel %vm226, %v224, -inf
    %v238 = vsel %vm228, %v225, -inf
    %v239 = vmax.f32 %v237, %v238
    %v240 = vrot.slane %v239, 4
    %v241 = vmax.f32 %v239, %v240
    %v242 = vrot.slane %v241, 2
    %v243 = vmax.f32 %v241, %v242
    %v244 = vrot.slane %v243, 1
    %v245 = vmax.f32 %v243, %v244
    %246 = vrot.lane.b32.xlu0 %v197, 16
    %v247 = vpop.permute.xlu0 %246
    %v249 = vadd.f32 %v236, %v247
    %v250 = vadd.f32 %v245, %v247
    %v251 = vmax.f32 %v249, 0.0
    %v252 = vmax.f32 %v250, 0.0
    %vm253 = vcmask 1043456
    %v254 = vrot.slane %v108, 4
    %v255 = vrot.slane %v111, 4
    %v256 = vsel %vm253, %v254, %v255
    %v257 = vrot.slane %v116, 4
    %v258 = vrot.slane %v119, 4
    %v259 = vsel %vm253, %v257, %v258
    %260 = vrot.lane.b32.xlu0 %v256, 96
    %v261 = vpop.permute.xlu0 %260
    %262 = vrot.lane.b32.xlu0 %v255, 96
    %v263 = vpop.permute.xlu0 %262
    %264 = vrot.lane.b32.xlu0 %v259, 96
    %v265 = vpop.permute.xlu0 %264
    %266 = vrot.lane.b32.xlu0 %v258, 96
    %v267 = vpop.permute.xlu0 %266
    %v272 = vadd.f32 %v222, %v261
    %v273 = vadd.f32 %v223, %v263
    %v274 = vadd.f32 %v224, %v265
    %v275 = vadd.f32 %v225, %v267
    %vm276 = vcmask 523712
    %v277 = vsel %vm276, %v272, -inf
    %vm278 = vcmask 519616
    %v279 = vsel %vm278, %v273, -inf
    %v280 = vmax.f32 %v277, %v279
    %v281 = vrot.slane %v280, 4
    %v282 = vmax.f32 %v280, %v281
    %v283 = vrot.slane %v282, 2
    %v284 = vmax.f32 %v282, %v283
    %v285 = vrot.slane %v284, 1
    %v286 = vmax.f32 %v284, %v285
    %v287 = vsel %vm276, %v274, -inf
    %v288 = vsel %vm278, %v275, -inf
    %v289 = vmax.f32 %v287, %v288
    %v290 = vrot.slane %v289, 4
    %v291 = vmax.f32 %v289, %v290
    %v292 = vrot.slane %v291, 2
    %v293 = vmax.f32 %v291, %v292
    %v294 = vrot.slane %v293, 1
    %v295 = vmax.f32 %v293, %v294
    %296 = vrot.lane.b32.xlu0 %v197, 40
    %v297 = vpop.permute.xlu0 %296
    %v299 = vadd.f32 %v286, %v297
    %v300 = vadd.f32 %v295, %v297
    %v301 = vmax.f32 %v299, 0.0
    %v302 = vmax.f32 %v300, 0.0
    %v305 = vrot.slane %v202, 7
    %vm306 = vcmask 1041409
    %v307 = vsel %vm306, %v305, %v201
    %v311 = vrot.slane %v252, 7
    %v312 = vsel %vm306, %v311, %v251
    %313 = vrot.lane.b32.xlu0 %v312, 112
    %v314 = vpop.permute.xlu0 %313
    %v318 = vrot.slane %v302, 7
    %v319 = vsel %vm306, %v318, %v301
    %320 = vrot.lane.b32.xlu0 %v319, 88
    %v321 = vpop.permute.xlu0 %320
    %v323 = vsel %vm173, %v307, %v314
    %vm324 = vcmask 130048
    %v325 = vsel %vm324, %v323, %v321
    %v326 = vpack.c.bf16 %v325, %v325
    %v327 = vld [vmem:[%s3] sm:$0xf]
    %v328 = vld [vmem:[%s3 + $0x4] sm:$0xf]
    %v329 = vld [vmem:[%s3 + $0x8] sm:$0xf]
    %v330 = vld [vmem:[%s4] sm:$0x1]
    %v332 = vlaneseq
    %v333 = vshrl.u32 %v332, 7
    %v334 = vsub.s32 0, %v333
    %v335 = vrot.slane %v330, %v334
    %v340 = vunpack.c.l.b16 %v327
    %v341 = vunpack.c.l.b16 %v328
    %v342 = vunpack.c.l.b16 %v329
    %v343 = vpack.c.b16 %v341, %v340
    %v344 = vpack.c.b16 %v342, %v342
    %vm346 = vcmask 195584
    %v348 = vsel %vm346, %v326, 0
    %v351 = vsel %vm253, %v344, 0
    %353 = vmatprep.subr.bf16.mxu0 0
    %354 = vmatpush1.bf16.msra.mxu0 %v343
    %355 = vmatprep.subr.bf16.mxu0 0
    %356 = vmatpush1.bf16.msra.mxu0 %v351
    %357 = vmatprep.subr.bf16.mxu0 0
    %358 = vmatpush1.bf16.msra.mxu0 0
    %359 = vmatprep.subr.bf16.mxu0 0
    %360 = vmatpush1.bf16.msra.mxu0 0
    %361 = vmatprep.subr.bf16.mxu0 0
    %362 = vmatpush1.bf16.msra.mxu0 0
    %363 = vmatprep.subr.bf16.mxu0 0
    %364 = vmatpush1.bf16.msra.mxu0 0
    %365 = vmatprep.subr.bf16.mxu0 0
    %366 = vmatpush1.bf16.msra.mxu0 0
    %367 = vmatprep.subr.bf16.mxu0 0
    %368 = vmatpush1.bf16.msra.mxu0 0
    %369 = vmatprep.subr.bf16.mxu0 0
    %370 = vmatpush1.bf16.msra.mxu0 0
    %371 = vmatprep.subr.bf16.mxu0 0
    %372 = vmatpush1.bf16.msra.mxu0 0
    %373 = vmatprep.subr.bf16.mxu0 0
    %374 = vmatpush1.bf16.msra.mxu0 0
    %375 = vmatprep.subr.bf16.mxu0 0
    %376 = vmatpush1.bf16.msra.mxu0 0
    %377 = vmatprep.subr.bf16.mxu0 0
    %378 = vmatpush1.bf16.msra.mxu0 0
    %379 = vmatprep.subr.bf16.mxu0 0
    %380 = vmatpush1.bf16.msra.mxu0 0
    %381 = vmatprep.subr.bf16.mxu0 0
    %382 = vmatpush1.bf16.msra.mxu0 0
    %383 = vmatprep.subr.bf16.mxu0 0
    %384 = vmatpush1.bf16.msra.mxu0 0
    %385 = vmatprep.mubr.bf16.mxu0 0
    %386 = vmatmul.mubr.bf16.gmra.mrb[0].mxu0 %v348
    %v387 = vpop.f32.mrb[0].mxu0
    %v388 = vadd.f32 %v335, %v387
    %v389 = vpop.f32.mrb[0].mxu0
    %v390 = vpop.f32.mrb[0].mxu0
    %v391 = vpop.f32.mrb[0].mxu0
    %392 = vdwg.mxu0
    %vm393 = vcmask 17408
    %394 = vst.msk [vmem:[#allocation5] sm:$0x3] %vm393, %v388
    // Predicated region
    $region26: #{tpu_custom_call.1} parent=1 // pred_check
      _
    $region27: #{tpu_custom_call.1} parent=1 // pred_check_branch
      %396 = sbr.rel (0) target = $region29
    $region28: #{tpu_custom_call.1} parent=1 // pred_region
      %s398 = ssub.s32 32, 32
      %399 = vsyncadd [#allocation4], %s398
      %s401 = sshll.u32 [#allocation5], 4
      %s402 = int_to_ptr.vmem [resolvable:$true] %s401
      %404 = dma.vmem_to_hbm [thread:$0]  %s402, 32, %s5, [#allocation4]
    $region29: #{tpu_custom_call.1} parent=1 // pred_fallthru
      _
    // Predicated region
    $region30: #{tpu_custom_call.1} parent=1 // pred_check
      _
    $region31: #{tpu_custom_call.1} parent=1 // pred_check_branch
      %406 = sbr.rel (0) target = $region33
    $region32: #{tpu_custom_call.1} parent=1 // pred_region
      %407 = dma.done [#allocation4], 32
    $region33: #{tpu_custom_call.1} parent=1 // pred_fallthru
      _
    %408 = vsyncpa [#allocation3], 1
    %409 = vsyncpa [#allocation4], 1

</llo_original>
